<compile_context>
chip_gen: v6e
topology: v6e:2x2x1
jax: 0.10.0
libtpu: 0.0.40
codegen_flags: <defaults>
</compile_context>

<pallas_src>
import jax
import jax.numpy as jnp
from jax.experimental import pallas as pl
from jax.experimental.pallas import tpu as pltpu

_LANES = 128
_MAX_TILE_ROWS = 2048  # (2048, 128) f32 block = 1 MiB; 2 inputs x 2 buffers = 4 MiB VMEM.


def _cdiv(a: int, b: int) -> int:
    return -(-a // b)


def _round_up(a: int, b: int) -> int:
    return _cdiv(a, b) * b


def _jsd_kernel(p_ref, q_ref, out_ref, acc_ref):
    k = pl.program_id(1)

    @pl.when(k == 0)
    def _init():
        acc_ref[...] = jnp.zeros_like(acc_ref)

    p = p_ref[...].astype(jnp.float32)
    q = q_ref[...].astype(jnp.float32)

    # log p - log(0.5*(p+q)) == log(2*p/(p+q)):
    # 2 logs + 1 reciprocal per element instead of 3 logs (EUP relief).
    # Zero probabilities contribute exactly 0 (lim_{x->0} x*log x = 0).
    r = pl.reciprocal(p + q, approx=False)
    term = (jnp.where(p > 0.0, p * jnp.log(2.0 * p * r), 0.0)
            + jnp.where(q > 0.0, q * jnp.log(2.0 * q * r), 0.0))

    # Lane-preserving accumulation into an (8, 128) vreg-shaped accumulator
    # (pure VPU adds); the single cross-lane reduce happens once in the wrapper.
    acc_ref[...] += jnp.sum(term.reshape(-1, 8, _LANES), axis=0)

    @pl.when(k == pl.num_programs(1) - 1)
    def _finalize():
        out_ref[...] = acc_ref[...]


def jsd_pallas(p: jax.Array, q: jax.Array) -> jax.Array:
    """Jensen-Shannon divergence matching the PyTorch JSD module (forward)."""
    assert p.shape == q.shape
    d = p.shape[-1]
    n_rows = p.size // d          # batchmean divisor (rows of the (-1, D) view)
    total = p.size

    # Lane-dense layout: flatten all elements and view as (rows, 128).
    rows_needed = _cdiv(total, _LANES)
    rows8 = _round_up(max(rows_needed, 1), 8)

    # Split across 2 TensorCores (v7x) only when the problem is big enough.
    num_shards = 2 if rows8 >= 2 * _MAX_TILE_ROWS else 1
    total_steps = _round_up(max(num_shards, _cdiv(rows8, _MAX_TILE_ROWS)), num_shards)
    steps_per_shard = total_steps // num_shards
    tile = _round_up(_cdiv(rows8, total_steps), 8)
    padded_rows = total_steps * tile
    padded_total = padded_rows * _LANES

    p_flat = p.reshape(-1)
    q_flat = q.reshape(-1)
    pad = padded_total - total
    if pad:
        # Padding with p = q = 1 contributes exactly 0 to the sum.
        p_flat = jnp.concatenate([p_flat, jnp.ones((pad,), dtype=p_flat.dtype)])
        q_flat = jnp.concatenate([q_flat, jnp.ones((pad,), dtype=q_flat.dtype)])
    p2 = p_flat.reshape(padded_rows, _LANES)
    q2 = q_flat.reshape(padded_rows, _LANES)

    def in_map(s, k):
        return (s * steps_per_shard + k, 0)

    bytes_per_elem = p2.dtype.itemsize
    cost = pl.CostEstimate(
        flops=10 * padded_total,
        transcendentals=3 * padded_total,
        bytes_accessed=2 * padded_total * bytes_per_elem + num_shards * 8 * _LANES * 4,
    )

    partials = pl.pallas_call(
        _jsd_kernel,
        out_shape=jax.ShapeDtypeStruct((num_shards * 8, _LANES), jnp.float32),
        grid_spec=pltpu.PrefetchScalarGridSpec(
            num_scalar_prefetch=0,
            grid=(num_shards, steps_per_shard),
            in_specs=[
                pl.BlockSpec((tile, _LANES), in_map),
                pl.BlockSpec((tile, _LANES), in_map),
            ],
            out_specs=pl.BlockSpec((8, _LANES), lambda s, k: (s, 0)),
            scratch_shapes=[pltpu.VMEM((8, _LANES), jnp.float32)],
        ),
        compiler_params=pltpu.CompilerParams(
            dimension_semantics=("parallel", "arbitrary"),
        ),
        cost_estimate=cost,
    )(p2, q2)

    # Single cross-lane reduce + batchmean scale (tiny, done once outside the kernel).
    return 0.5 * jnp.sum(partials) / jnp.float32(n_rows)


def jsd_reference(p: jax.Array, q: jax.Array) -> jax.Array:
    """Pure-JAX reference mirroring the PyTorch module."""
    d = p.shape[-1]
    p2 = p.reshape(-1, d).astype(jnp.float32)
    q2 = q.reshape(-1, d).astype(jnp.float32)
    n = p2.shape[0]
    m = jnp.log(0.5 * (p2 + q2))
    kl_pm = jnp.sum(p2 * (jnp.log(p2) - m)) / n
    kl_qm = jnp.sum(q2 * (jnp.log(q2) - m)) / n
    return 0.5 * (kl_pm + kl_qm)


if __name__ == "__main__":
    # Small shapes: batch=2, seq=8, vocab=32 -> flattened rows N=16, D=32.
    key = jax.random.PRNGKey(0)
    k1, k2 = jax.random.split(key)
    logits_p = jax.random.normal(k1, (2, 8, 32), dtype=jnp.float32)
    logits_q = jax.random.normal(k2, (2, 8, 32), dtype=jnp.float32)
    p = jax.nn.softmax(logits_p, axis=-1)
    q = jax.nn.softmax(logits_q, axis=-1)

    out = jax.block_until_ready(jsd_pallas(p, q))
    ref = jsd_reference(p, q)
    assert jnp.allclose(out, ref, rtol=1e-4, atol=1e-6), (out, ref)

    print("KERNEL_OK")
</pallas_src>

<mosaic_0001>
module attributes {stable_mosaic.version = 11 : i64} {
  func.func @_jsd_kernel(%arg0: i32, %arg1: i32, %arg2: memref<8x128xf32, #tpu.memory_space<vmem>>, %arg3: memref<8x128xf32, #tpu.memory_space<vmem>>, %arg4: memref<8x128xf32, #tpu.memory_space<vmem>>, %arg5: memref<8x128xf32, #tpu.memory_space<vmem>>) attributes {dimension_semantics = [#tpu.dimension_semantics<parallel>, #tpu.dimension_semantics<arbitrary>], iteration_bounds = array<i64: 1, 1>, scalar_prefetch = 0 : i64, scratch_operands = 1 : i64, tpu.core_type = #tpu.core_type<tc>, window_params = [{transform_indices = @transform_0, window_bounds = array<i64: 8, 128>}, {transform_indices = @transform_1, window_bounds = array<i64: 8, 128>}, {transform_indices = @transform_2, window_bounds = array<i64: 8, 128>}]} {
    %c0_i32 = arith.constant 0 : i32
    %0 = arith.cmpi eq, %arg1, %c0_i32 : i32
    %1 = arith.extui %0 : i1 to i32
    %c0_i32_0 = arith.constant 0 : i32
    %2 = arith.cmpi ne, %1, %c0_i32_0 : i32
    scf.if %2 {
      %cst_16 = arith.constant 0.000000e+00 : f32
      %34 = vector.broadcast %cst_16 : f32 to vector<8x128xf32>
      %c0_17 = arith.constant 0 : index
      %c0_18 = arith.constant 0 : index
      %35 = vector.load %arg5[%c0_17, %c0_18] : memref<8x128xf32, #tpu.memory_space<vmem>>, vector<8x128xf32>
      tpu.vector_store %arg5[%c0_17, %c0_18], %34 {strides = array<i32>} : memref<8x128xf32, #tpu.memory_space<vmem>>, vector<8x128xf32>,
    } else {
    }
    %c0 = arith.constant 0 : index
    %c0_1 = arith.constant 0 : index
    %3 = vector.load %arg2[%c0, %c0_1] : memref<8x128xf32, #tpu.memory_space<vmem>>, vector<8x128xf32>
    %c0_2 = arith.constant 0 : index
    %c0_3 = arith.constant 0 : index
    %4 = vector.load %arg3[%c0_2, %c0_3] : memref<8x128xf32, #tpu.memory_space<vmem>>, vector<8x128xf32>
    %5 = arith.addf %3, %4 : vector<8x128xf32>
    %6 = tpu.reciprocal %5 : vector<8x128xf32> -> vector<8x128xf32>
    %cst = arith.constant 0.000000e+00 : f32
    %7 = vector.broadcast %cst : f32 to vector<8x128xf32>
    %8 = arith.cmpf ogt, %3, %7 : vector<8x128xf32>
    %cst_4 = arith.constant 2.000000e+00 : f32
    %9 = vector.broadcast %cst_4 : f32 to vector<8x128xf32>
    %10 = arith.mulf %9, %3 : vector<8x128xf32>
    %11 = arith.mulf %10, %6 : vector<8x128xf32>
    %12 = math.log %11 : vector<8x128xf32>
    %13 = arith.mulf %3, %12 : vector<8x128xf32>
    %cst_5 = arith.constant 0.000000e+00 : f32
    %14 = vector.broadcast %cst_5 : f32 to vector<8x128xf32>
    %15 = arith.select %8, %13, %14 : vector<8x128xi1>, vector<8x128xf32>
    %cst_6 = arith.constant 0.000000e+00 : f32
    %16 = vector.broadcast %cst_6 : f32 to vector<8x128xf32>
    %17 = arith.cmpf ogt, %4, %16 : vector<8x128xf32>
    %cst_7 = arith.constant 2.000000e+00 : f32
    %18 = vector.broadcast %cst_7 : f32 to vector<8x128xf32>
    %19 = arith.mulf %18, %4 : vector<8x128xf32>
    %20 = arith.mulf %19, %6 : vector<8x128xf32>
    %21 = math.log %20 : vector<8x128xf32>
    %22 = arith.mulf %4, %21 : vector<8x128xf32>
    %cst_8 = arith.constant 0.000000e+00 : f32
    %23 = vector.broadcast %cst_8 : f32 to vector<8x128xf32>
    %24 = arith.select %17, %22, %23 : vector<8x128xi1>, vector<8x128xf32>
    %25 = arith.addf %15, %24 : vector<8x128xf32>
    %c0_9 = arith.constant 0 : index
    %c0_10 = arith.constant 0 : index
    %26 = vector.load %arg5[%c0_9, %c0_10] : memref<8x128xf32, #tpu.memory_space<vmem>>, vector<8x128xf32>
    %27 = vector.shape_cast %25 : vector<8x128xf32> to vector<1x8x128xf32>
    %cst_11 = arith.constant dense<0.000000e+00> : vector<8x128xf32>
    %28 = vector.multi_reduction <add>, %27, %cst_11 [0] : vector<1x8x128xf32> to vector<8x128xf32>
    %29 = arith.addf %26, %28 : vector<8x128xf32>
    %c0_12 = arith.constant 0 : index
    %c0_13 = arith.constant 0 : index
    %30 = vector.load %arg5[%c0_12, %c0_13] : memref<8x128xf32, #tpu.memory_space<vmem>>, vector<8x128xf32>
    tpu.vector_store %arg5[%c0_12, %c0_13], %29 {strides = array<i32>} : memref<8x128xf32, #tpu.memory_space<vmem>>, vector<8x128xf32>,
    %c0_i32_14 = arith.constant 0 : i32
    %31 = arith.cmpi eq, %arg1, %c0_i32_14 : i32
    %32 = arith.extui %31 : i1 to i32
    %c0_i32_15 = arith.constant 0 : i32
    %33 = arith.cmpi ne, %32, %c0_i32_15 : i32
    scf.if %33 {
      %c0_16 = arith.constant 0 : index
      %c0_17 = arith.constant 0 : index
      %34 = vector.load %arg5[%c0_16, %c0_17] : memref<8x128xf32, #tpu.memory_space<vmem>>, vector<8x128xf32>
      %c0_18 = arith.constant 0 : index
      %c0_19 = arith.constant 0 : index
      %35 = vector.load %arg4[%c0_18, %c0_19] : memref<8x128xf32, #tpu.memory_space<vmem>>, vector<8x128xf32>
      tpu.vector_store %arg4[%c0_18, %c0_19], %34 {strides = array<i32>} : memref<8x128xf32, #tpu.memory_space<vmem>>, vector<8x128xf32>,
    } else {
    }
    return
  }
  func.func @transform_0(%arg0: i32, %arg1: i32) -> (i32, i32) {
    %c1_i32 = arith.constant 1 : i32
    %0 = arith.muli %arg0, %c1_i32 : i32
    %1 = arith.addi %0, %arg1 : i32
    %c0_i32 = arith.constant 0 : i32
    %c0_i32_0 = arith.constant 0 : i32
    return %1, %c0_i32 : i32, i32
  }
  func.func @transform_1(%arg0: i32, %arg1: i32) -> (i32, i32) {
    %c1_i32 = arith.constant 1 : i32
    %0 = arith.muli %arg0, %c1_i32 : i32
    %1 = arith.addi %0, %arg1 : i32
    %c0_i32 = arith.constant 0 : i32
    %c0_i32_0 = arith.constant 0 : i32
    return %1, %c0_i32 : i32, i32
  }
  func.func @transform_2(%arg0: i32, %arg1: i32) -> (i32, i32) {
    %c0_i32 = arith.constant 0 : i32
    %c0_i32_0 = arith.constant 0 : i32
    return %arg0, %c0_i32 : i32, i32
  }
}

</mosaic_0001>

<llo_original>
// kernel: tpu_custom_call.1
$region0: #{tpu_custom_call.1}
  #allocation0 [shape = 'u32[]', space=smem, size = 0x4, offset = 0x4, fixed_abs, tag = 'smem constant byte address 0x4 - core index']
  #allocation1 [shape = 'u32[144,128]{1,0:T(1,128)}', space=vmem, size = 0x12000, scoped, tag = 'internal scratch']
  #allocation2 [shape = 'f32[8,128]{1,0:T(8,128)}', space=vmem, size = 0x1000, scoped, tag = 'scratch operand']
  %s0 = inlined_call_operand.hbm [shape: f32[8,128], index: 0, kind: input, shape index: {}]
  %s1 = inlined_call_operand.hbm [shape: f32[8,128], index: 1, kind: input, shape index: {}]
  %s2 = inlined_call_operand.hbm [shape: f32[8,128], index: 2, kind: output, shape index: {}]
  %s3 = sld [smem:[#allocation0]]
  $region34: #{tpu_custom_call.1} parent=0
    _
  %s5 = ssub.s32 1, %s3
  %s6 = scalar_select 0, %s5, %s3
  $region1: #{tpu_custom_call.1} parent=0
    #allocation3 [shape = 'u8[4096]{0}', space=vmem, size = 0x1000, scoped, tag = 'input window, operand 0, single buffered']
    #allocation4 [shape = 's32[1]{0}', space=sflag, size = 0x4, scoped, tag = 'scoped memory for tpu_custom_call.1']
    #allocation5 [shape = 's32[1]{0}', space=sflag, size = 0x4, scoped, tag = 'scoped memory for tpu_custom_call.1']
    #allocation6 [shape = 'u8[4096]{0}', space=vmem, size = 0x1000, scoped, tag = 'input window, operand 1, single buffered']
    #allocation7 [shape = 's32[1]{0}', space=sflag, size = 0x4, scoped, tag = 'scoped memory for tpu_custom_call.1']
    #allocation8 [shape = 'u8[4096]{0}', space=vmem, size = 0x1000, scoped, tag = 'output window, operand 0, single buffered']
    %7 = vsyncpa [#allocation4], 0
    %8 = vsyncpa [#allocation7], 0
    %9 = vsyncpa [#allocation5], 0
    // Predicated region
    $region2: #{tpu_custom_call.1} parent=1 // pred_check
      _
    $region3: #{tpu_custom_call.1} parent=1 // pred_check_branch
      %11 = sbr.rel (0) target = $region5
    $region4: #{tpu_custom_call.1} parent=1 // pred_region
      %s12 = sadd.s32 0, 0
      %s14 = ssub.s32 128, 128
      %15 = vsyncadd [#allocation4], %s14
      %s16 = smul.addr %s12, 128
      %s17 = scalar_lea.hbm %s0, %s16
      %s19 = sshll.u32 [#allocation3], 4
      %s20 = int_to_ptr.vmem [resolvable:$true] %s19
      %22 = dma.hbm_to_vmem [thread:$0]  %s17, 128, %s20, [#allocation4]
    $region5: #{tpu_custom_call.1} parent=1 // pred_fallthru
      _
    // Predicated region
    $region6: #{tpu_custom_call.1} parent=1 // pred_check
      _
    $region7: #{tpu_custom_call.1} parent=1 // pred_check_branch
      %24 = sbr.rel (0) target = $region9
    $region8: #{tpu_custom_call.1} parent=1 // pred_region
      %s25 = sadd.s32 0, 0
      %s27 = ssub.s32 128, 128
      %28 = vsyncadd [#allocation7], %s27
      %s29 = smul.addr %s25, 128
      %s30 = scalar_lea.hbm %s1, %s29
      %s32 = sshll.u32 [#allocation6], 4
      %s33 = int_to_ptr.vmem [resolvable:$true] %s32
      %35 = dma.hbm_to_vmem [thread:$0]  %s30, 128, %s33, [#allocation7]
    $region9: #{tpu_custom_call.1} parent=1 // pred_fallthru
      _
    // Predicated region
    $region10: #{tpu_custom_call.1} parent=1 // pred_check
      _
    $region11: #{tpu_custom_call.1} parent=1 // pred_check_branch
      %37 = sbr.rel (0) target = $region13
    $region12: #{tpu_custom_call.1} parent=1 // pred_region
      %38 = dma.done [#allocation4], 128
    $region13: #{tpu_custom_call.1} parent=1 // pred_fallthru
      _
    // Predicated region
    $region14: #{tpu_custom_call.1} parent=1 // pred_check
      _
    $region15: #{tpu_custom_call.1} parent=1 // pred_check_branch
      %40 = sbr.rel (0) target = $region17
    $region16: #{tpu_custom_call.1} parent=1 // pred_region
      %41 = dma.done [#allocation7], 128
    $region17: #{tpu_custom_call.1} parent=1 // pred_fallthru
      _
    %s42 = sadd.s32 0, 0
    %s43 = sadd.s32 0, 0
    %p44 = scmp.eq.s32.totalorder 0, 0
    // Predicated region
    $region18: #{tpu_custom_call.1} parent=1 // pred_check
      %p45 = pneg %p44
    $region19: #{tpu_custom_call.1} parent=1 // pred_check_branch
      %47 = sbr.rel (%p45) target = $region21
    $region20: #{tpu_custom_call.1} parent=1 // pred_region
      %48 = vst [vmem:[#allocation2] sm:$0xff] 0.0
    $region21: #{tpu_custom_call.1} parent=1 // pred_fallthru
      _
    %v49 = vld [vmem:[#allocation3] sm:$0xff]
    %v50 = vld [vmem:[#allocation6] sm:$0xff]
    %v51 = vadd.f32 %v49, %v50
    %v52 = vrcp.pop %v51
    %vm53 = vcmp.gt.f32.partialorder %v49, 0.0
    %v54 = vmul.f32 %v49, 2.0
    %v55 = vmul.f32 %v54, %v52
    %v56 = vlog2.pop %v55
    %v57 = vmul.f32 %v56, 0.6931472
    %v58 = vmul.f32 %v49, %v57
    %v59 = vsel %vm53, %v58, 0.0
    %vm60 = vcmp.gt.f32.partialorder %v50, 0.0
    %v61 = vmul.f32 %v50, 2.0
    %v62 = vmul.f32 %v61, %v52
    %v63 = vlog2.pop %v62
    %v64 = vmul.f32 %v63, 0.6931472
    %v65 = vmul.f32 %v50, %v64
    %v66 = vsel %vm60, %v65, 0.0
    %v67 = vadd.f32 %v59, %v66
    %v68 = vld [vmem:[#allocation2] sm:$0xff]
    %v69 = vadd.f32 %v67, 0.0
    %v70 = vadd.f32 %v68, %v69
    %71 = vst [vmem:[#allocation2] sm:$0xff] %v70
    // Predicated region
    $region22: #{tpu_custom_call.1} parent=1 // pred_check
      %p72 = pneg %p44
    $region23: #{tpu_custom_call.1} parent=1 // pred_check_branch
      %74 = sbr.rel (%p72) target = $region25
    $region24: #{tpu_custom_call.1} parent=1 // pred_region
      %v75 = vld [vmem:[#allocation2] sm:$0xff]
      %76 = vst [vmem:[#allocation8] sm:$0xff] %v75
    $region25: #{tpu_custom_call.1} parent=1 // pred_fallthru
      _
    // Predicated region
    $region26: #{tpu_custom_call.1} parent=1 // pred_check
      _
    $region27: #{tpu_custom_call.1} parent=1 // pred_check_branch
      %78 = sbr.rel (0) target = $region29
    $region28: #{tpu_custom_call.1} parent=1 // pred_region
      %s80 = ssub.s32 128, 128
      %81 = vsyncadd [#allocation5], %s80
      %s83 = sshll.u32 [#allocation8], 4
      %s84 = int_to_ptr.vmem [resolvable:$true] %s83
      %86 = dma.vmem_to_hbm [thread:$0]  %s84, 128, %s2, [#allocation5]
    $region29: #{tpu_custom_call.1} parent=1 // pred_fallthru
      _
    // Predicated region
    $region30: #{tpu_custom_call.1} parent=1 // pred_check
      _
    $region31: #{tpu_custom_call.1} parent=1 // pred_check_branch
      %88 = sbr.rel (0) target = $region33
    $region32: #{tpu_custom_call.1} parent=1 // pred_region
      %89 = dma.done [#allocation5], 128
    $region33: #{tpu_custom_call.1} parent=1 // pred_fallthru
      _
    %90 = vsyncpa [#allocation4], 1
    %91 = vsyncpa [#allocation7], 1
    %92 = vsyncpa [#allocation5], 1

</llo_original>
